<compile_context>
chip_gen: v6e
topology: v6e:2x2x1
jax: 0.10.0
libtpu: 0.0.40
codegen_flags: <defaults>
</compile_context>

<pallas_src>
import functools

import jax
import jax.numpy as jnp
from jax.experimental import pallas as pl
from jax.experimental.pallas import tpu as pltpu

_LANE = 128
_MiB = 1024 * 1024


def _round_up(v, m):
    return ((v + m - 1) // m) * m


def _equivariant_kernel(x_ref, w1_ref, w2_ref, b_ref, o_ref, *, n_valid):
    """One batch-tile of the DeepSets equivariant layer.

    x_ref : (TB, N_pad, d_in)   activations (compute dtype), zero rows beyond n_valid
    w1_ref: (d_in,  2*d_hp)     [w1_self | w1_mean], hidden width zero-padded to d_hp
    w2_ref: (d_hp,  2*d_hp)     [w2_self | w2_mean]
    b_ref : (4, d_hp) f32       rows = b1_self, b2_self, b1_mean, b2_mean
    o_ref : (TB, N_out, d_out)  output tile (d_out = d_hidden or d_hp)
    """
    tb, n_pad, d_in = x_ref.shape
    d_hp = w2_ref.shape[0]
    n_out, d_out = o_ref.shape[1], o_ref.shape[2]

    xb = x_ref[...]                                             # (TB, N_pad, d_in)

    # ---- self branch: one (TB*N_pad, d_in) @ (d_in, d_hp) GEMM, f32 accumulation ----
    x2 = xb.reshape(tb * n_pad, d_in)                           # layout-free (N_pad sublane-aligned)
    h = jnp.dot(x2, w1_ref[:, :d_hp],
                preferred_element_type=jnp.float32) + b_ref[0:1, :]
    h = jnp.maximum(h, 0.0).astype(w2_ref.dtype)
    self_term = (jnp.dot(h, w2_ref[:, :d_hp],
                         preferred_element_type=jnp.float32) + b_ref[1:2, :])
    self_term = self_term.reshape(tb, n_pad, d_hp)

    # ---- mean branch: f32 accumulation in the reduction; padded rows are zero,
    #      so dividing by the true N gives the exact mean ----
    xm = (jnp.sum(xb, axis=1, dtype=jnp.float32) * (1.0 / n_valid)).astype(x2.dtype)
    hm = jnp.dot(xm, w1_ref[:, d_hp:],
                 preferred_element_type=jnp.float32) + b_ref[2:3, :]
    hm = jnp.maximum(hm, 0.0).astype(w2_ref.dtype)
    mean_term = (jnp.dot(hm, w2_ref[:, d_hp:],
                         preferred_element_type=jnp.float32) + b_ref[3:4, :])   # (TB, d_hp)

    out = self_term + mean_term[:, None, :]                     # (TB, N_pad, d_hp)
    o_ref[...] = out[:, :n_out, :d_out].astype(o_ref.dtype)


def prepare_params(params, *, compute_dtype=jnp.float32):
    """One-time pack / lane-pad / cast of the 8 Linear params (hoisted out of the hot path).

    params: dict with w1_self/b1_self/w2_self/b2_self/w1_mean/b1_mean/w2_mean/b2_mean;
    weights stored (in, out) (already transposed vs. torch nn.Linear), biases (1, out).
    Padded hidden/output columns are zero, so results are exact after discarding them.
    """
    d_in, d_hidden = params["w1_self"].shape
    d_hp = max(_LANE, _round_up(d_hidden, _LANE))
    ph = d_hp - d_hidden
    cdt = jnp.dtype(compute_dtype)

    def pad_cols(w):        # (r, d_hidden) -> (r, d_hp)
        return jnp.pad(w, ((0, 0), (0, ph)))

    def pad_rows_cols(w):   # (d_hidden, d_hidden) -> (d_hp, d_hp)
        return jnp.pad(w, ((0, ph), (0, ph)))

    w1 = jnp.concatenate(
        [pad_cols(params["w1_self"]), pad_cols(params["w1_mean"])], axis=1).astype(cdt)
    w2 = jnp.concatenate(
        [pad_rows_cols(params["w2_self"]), pad_rows_cols(params["w2_mean"])], axis=1).astype(cdt)
    b = jnp.concatenate(
        [pad_cols(params["b1_self"]), pad_cols(params["b2_self"]),
         pad_cols(params["b1_mean"]), pad_cols(params["b2_mean"])], axis=0
    ).astype(jnp.float32)                                       # biases stay f32
    return {"w1": w1, "w2": w2, "b": b,
            "d_in": d_in, "d_hidden": d_hidden, "d_h_pad": d_hp,
            "compute_dtype": cdt}


def equivariant_layer(x, prepared, *, tb=None, pad_output=False):
    """x: [B, N, d_in] -> [B, N, d_hidden] in x.dtype (f32 accumulation inside).

    prepared: output of prepare_params().  pad_output=True writes a lane-padded
    (B, N, d_h_pad) slab (lane-dense stores, wrapper slice) — can win for wide outputs
    on v7x; the default writes the true width directly (no write amplification).
    """
    B, N, d_in = x.shape
    assert d_in == prepared["d_in"], "d_in mismatch with prepared params"
    d_hidden, d_hp = prepared["d_hidden"], prepared["d_h_pad"]
    cdt = prepared["compute_dtype"]
    elt = cdt.itemsize
    out_dtype = x.dtype
    out_elt = jnp.dtype(out_dtype).itemsize

    # ---- sublane-align N so the in-kernel reshape is layout-free ----
    sub_in = 16 if elt == 2 else 8
    sub_out = 16 if out_elt == 2 else 8
    n_pad = _round_up(N, sub_in)
    x_c = x.astype(cdt)
    if n_pad != N:
        x_c = jnp.pad(x_c, ((0, 0), (0, n_pad - N), (0, 0)))    # zero rows; mean uses true N

    d_out = d_hp if pad_output else d_hidden

    # ---- (sublane, lane)-tiled VMEM footprints ----
    x_tile_b = n_pad * _round_up(d_in, _LANE) * elt                        # per batch element
    o_tile_b = _round_up(N, sub_out) * _round_up(d_out, _LANE) * out_elt
    per_b = 2 * (x_tile_b + o_tile_b)                                      # double-buffered x / out
    w_bytes = (_round_up(d_in, sub_in) * 2 * d_hp + d_hp * 2 * d_hp) * elt \
              + _round_up(4, 8) * d_hp * 4                                 # single-buffered weights
    headroom = 4 * _MiB

    try:
        phys = int(getattr(pltpu.get_tpu_info(), "vmem_capacity_bytes", 64 * _MiB))
    except Exception:
        phys = 64 * _MiB                                                   # conservative (v7x per-TC)
    vmem_target = min(phys * 3 // 4, 96 * _MiB)                            # 48 MiB v7x, 96 MiB 128-MiB parts

    kind = ""
    try:
        kind = jax.devices()[0].device_kind.lower()
    except Exception:
        pass
    multi_tc = ("v7" in kind) or ("7x" in kind)                            # v7x: 2 TensorCores/chip

    if tb is None:
        act_budget = max(per_b, vmem_target - w_bytes - headroom)
        tb = max(1, min(B, act_budget // per_b))                           # as large as fits
        if multi_tc and B >= 2 and pl.cdiv(B, tb) < 2:
            tb = pl.cdiv(B, 2)                                             # feed both TCs ("parallel" axis)
    tb = int(max(1, min(tb, B)))
    grid = (pl.cdiv(B, tb),)                                               # partial trailing block is safe

    flops = (2 * B * n_pad * d_in * d_hp + 2 * B * n_pad * d_hp * d_hp     # self branch
             + 2 * B * d_in * d_hp + 2 * B * d_hp * d_hp)                  # mean branch
    bytes_accessed = B * n_pad * d_in * elt + B * N * d_out * out_elt + w_bytes
    cost = pl.CostEstimate(flops=int(flops), transcendentals=0,
                           bytes_accessed=int(bytes_accessed))

    kernel = functools.partial(_equivariant_kernel, n_valid=N)

    def run(single_buffer_weights):
        pm = pl.Buffered(1) if single_buffer_weights else None
        w_mult = 1 if single_buffer_weights else 2
        need = tb * per_b + w_mult * w_bytes + headroom
        vmem_limit = int(max(16 * _MiB, min(need, phys - 8 * _MiB)))
        return pl.pallas_call(
            kernel,
            out_shape=jax.ShapeDtypeStruct((B, N, d_out), out_dtype),
            grid_spec=pltpu.PrefetchScalarGridSpec(
                num_scalar_prefetch=0,
                grid=grid,
                in_specs=[
                    pl.BlockSpec((tb, n_pad, d_in), lambda b: (b, 0, 0)),             # x (batch-tiled)
                    pl.BlockSpec((d_in, 2 * d_hp), lambda b: (0, 0), pipeline_mode=pm),  # [w1_self|w1_mean]
                    pl.BlockSpec((d_hp, 2 * d_hp), lambda b: (0, 0), pipeline_mode=pm),  # [w2_self|w2_mean]
                    pl.BlockSpec((4, d_hp), lambda b: (0, 0), pipeline_mode=pm),         # packed biases
                ],
                out_specs=pl.BlockSpec((tb, N, d_out), lambda b: (b, 0, 0)),
            ),
            compiler_params=pltpu.CompilerParams(
                dimension_semantics=("parallel",),
                vmem_limit_bytes=vmem_limit),
            cost_estimate=cost,
        )(x_c, prepared["w1"], prepared["w2"], prepared["b"])

    try:
        out = run(True)
    except Exception:
        # Fallback for runtimes that reject single-buffered (Buffered(1)) constant blocks.
        out = run(False)

    return out[:, :, :d_hidden] if pad_output else out


def init_params(key, d_in, d_hidden):
    """Deterministic synthetic init (shapes match the torch module's __init__)."""
    ks = jax.random.split(key, 8)
    s_in = 1.0 / jnp.sqrt(d_in)
    s_h = 1.0 / jnp.sqrt(d_hidden)
    u = jax.random.uniform
    return {
        # weights stored (in, out); biases as (1, out) for TPU-friendly 2D layout
        "w1_self": u(ks[0], (d_in, d_hidden), jnp.float32, -s_in, s_in),
        "b1_self": u(ks[1], (1, d_hidden), jnp.float32, -s_in, s_in),
        "w2_self": u(ks[2], (d_hidden, d_hidden), jnp.float32, -s_h, s_h),
        "b2_self": u(ks[3], (1, d_hidden), jnp.float32, -s_h, s_h),
        "w1_mean": u(ks[4], (d_in, d_hidden), jnp.float32, -s_in, s_in),
        "b1_mean": u(ks[5], (1, d_hidden), jnp.float32, -s_in, s_in),
        "w2_mean": u(ks[6], (d_hidden, d_hidden), jnp.float32, -s_h, s_h),
        "b2_mean": u(ks[7], (1, d_hidden), jnp.float32, -s_h, s_h),
    }


def _reference(x, p):
    """Pure-JAX reference reproducing the torch forward exactly."""
    def mlp(h, w1, b1, w2, b2):
        return jnp.maximum(h @ w1 + b1, 0.0) @ w2 + b2
    self_term = mlp(x, p["w1_self"], p["b1_self"], p["w2_self"], p["b2_self"])
    x_mean = jnp.mean(x, axis=-2, keepdims=True)
    mean_term = mlp(x_mean, p["w1_mean"], p["b1_mean"], p["w2_mean"], p["b2_mean"])
    return self_term + mean_term


if __name__ == "__main__":
    key = jax.random.PRNGKey(0)
    kx, kp, kx2 = jax.random.split(key, 3)

    # Case 1: aligned shapes (B=2, N=8, d_in=16, d_hidden=32).
    B, N, d_in, d_hidden = 2, 8, 16, 32
    params = init_params(kp, d_in, d_hidden)
    prepared = prepare_params(params)                    # one-time pack/pad (f32 compute path)

    x = jax.random.normal(kx, (B, N, d_in), dtype=jnp.float32)
    out = jax.block_until_ready(equivariant_layer(x, prepared))
    ref = _reference(x, params)
    assert out.shape == (B, N, d_hidden)
    # Tolerance covers default TPU f32-matmul pass differences between XLA and Mosaic.
    assert jnp.allclose(out, ref, atol=1e-3, rtol=1e-3), float(jnp.max(jnp.abs(out - ref)))

    # Case 2: awkward shapes — odd batch (partial trailing block) and N not a multiple of
    # the sublane tile (exercises zero-padded N + true-N mean path).
    B2, N2 = 3, 5
    x2 = jax.random.normal(kx2, (B2, N2, d_in), dtype=jnp.float32)
    out2 = jax.block_until_ready(equivariant_layer(x2, prepared))
    ref2 = _reference(x2, params)
    assert out2.shape == (B2, N2, d_hidden)
    assert jnp.allclose(out2, ref2, atol=1e-3, rtol=1e-3), float(jnp.max(jnp.abs(out2 - ref2)))

    print("KERNEL_OK")
</pallas_src>

<mosaic_0001>
module attributes {stable_mosaic.version = 11 : i64} {
  func.func @_equivariant_kernel(%arg0: i32, %arg1: memref<2x8x16xf32, #tpu.memory_space<vmem>>, %arg2: memref<16x256xf32, #tpu.memory_space<vmem>>, %arg3: memref<128x256xf32, #tpu.memory_space<vmem>>, %arg4: memref<4x128xf32, #tpu.memory_space<vmem>>, %arg5: memref<2x8x32xf32, #tpu.memory_space<vmem>>) attributes {dimension_semantics = [#tpu.dimension_semantics<parallel>], iteration_bounds = array<i64: 1>, scalar_prefetch = 0 : i64, scratch_operands = 0 : i64, tpu.core_type = #tpu.core_type<tc>, window_params = [{transform_indices = @transform_0, window_bounds = array<i64: 2, 8, 16>}, {pipeline_mode = #tpu.pipeline_mode<synchronous>, transform_indices = @transform_1, window_bounds = array<i64: 16, 256>}, {pipeline_mode = #tpu.pipeline_mode<synchronous>, transform_indices = @transform_2, window_bounds = array<i64: 128, 256>}, {pipeline_mode = #tpu.pipeline_mode<synchronous>, transform_indices = @transform_3, window_bounds = array<i64: 4, 128>}, {transform_indices = @transform_4, window_bounds = array<i64: 2, 8, 32>}]} {
    %c0 = arith.constant 0 : index
    %c0_0 = arith.constant 0 : index
    %c0_1 = arith.constant 0 : index
    %0 = vector.load %arg1[%c0, %c0_0, %c0_1] : memref<2x8x16xf32, #tpu.memory_space<vmem>>, vector<2x8x16xf32>
    %1 = vector.shape_cast %0 : vector<2x8x16xf32> to vector<16x16xf32>
    %c0_2 = arith.constant 0 : index
    %c0_3 = arith.constant 0 : index
    %2 = vector.load %arg2[%c0_2, %c0_3] : memref<16x256xf32, #tpu.memory_space<vmem>>, vector<16x128xf32>
    %cst = arith.constant dense<0.000000e+00> : vector<16x128xf32>
    %3 = tpu.matmul %1, %2, %cst {dimension_numbers = #tpu.dot_dimension_numbers<[1], [0], [0], [1], [0, 0, 1, 1], [], []>} : vector<16x16xf32>, vector<16x128xf32>, vector<16x128xf32> -> vector<16x128xf32>
    %c0_4 = arith.constant 0 : index
    %c0_5 = arith.constant 0 : index
    %4 = vector.load %arg4[%c0_4, %c0_5] : memref<4x128xf32, #tpu.memory_space<vmem>>, vector<1x128xf32>
    %5 = vector.broadcast %4 : vector<1x128xf32> to vector<16x128xf32>
    %6 = arith.addf %3, %5 : vector<16x128xf32>
    %cst_6 = arith.constant 0.000000e+00 : f32
    %7 = vector.broadcast %cst_6 : f32 to vector<16x128xf32>
    %8 = arith.maximumf %6, %7 : vector<16x128xf32>
    %c0_7 = arith.constant 0 : index
    %c0_8 = arith.constant 0 : index
    %9 = vector.load %arg3[%c0_7, %c0_8] : memref<128x256xf32, #tpu.memory_space<vmem>>, vector<128x128xf32>
    %cst_9 = arith.constant dense<0.000000e+00> : vector<16x128xf32>
    %10 = tpu.matmul %8, %9, %cst_9 {dimension_numbers = #tpu.dot_dimension_numbers<[1], [0], [0], [1], [0, 0, 1, 1], [], []>} : vector<16x128xf32>, vector<128x128xf32>, vector<16x128xf32> -> vector<16x128xf32>
    %c1 = arith.constant 1 : index
    %c0_10 = arith.constant 0 : index
    %11 = vector.load %arg4[%c1, %c0_10] : memref<4x128xf32, #tpu.memory_space<vmem>>, vector<1x128xf32>
    %12 = vector.broadcast %11 : vector<1x128xf32> to vector<16x128xf32>
    %13 = arith.addf %10, %12 : vector<16x128xf32>
    %14 = vector.shape_cast %13 : vector<16x128xf32> to vector<2x8x128xf32>
    %cst_11 = arith.constant dense<0.000000e+00> : vector<2x16xf32>
    %15 = vector.multi_reduction <add>, %0, %cst_11 [1] : vector<2x8x16xf32> to vector<2x16xf32>
    %cst_12 = arith.constant 1.250000e-01 : f32
    %16 = vector.broadcast %cst_12 : f32 to vector<2x16xf32>
    %17 = arith.mulf %15, %16 : vector<2x16xf32>
    %c0_13 = arith.constant 0 : index
    %c128 = arith.constant 128 : index
    %18 = vector.load %arg2[%c0_13, %c128] : memref<16x256xf32, #tpu.memory_space<vmem>>, vector<16x128xf32>
    %cst_14 = arith.constant dense<0.000000e+00> : vector<2x128xf32>
    %19 = tpu.matmul %17, %18, %cst_14 {dimension_numbers = #tpu.dot_dimension_numbers<[1], [0], [0], [1], [0, 0, 1, 1], [], []>} : vector<2x16xf32>, vector<16x128xf32>, vector<2x128xf32> -> vector<2x128xf32>
    %c2 = arith.constant 2 : index
    %c0_15 = arith.constant 0 : index
    %20 = vector.load %arg4[%c2, %c0_15] : memref<4x128xf32, #tpu.memory_space<vmem>>, vector<1x128xf32>
    %21 = vector.broadcast %20 : vector<1x128xf32> to vector<2x128xf32>
    %22 = arith.addf %19, %21 : vector<2x128xf32>
    %cst_16 = arith.constant 0.000000e+00 : f32
    %23 = vector.broadcast %cst_16 : f32 to vector<2x128xf32>
    %24 = arith.maximumf %22, %23 : vector<2x128xf32>
    %c0_17 = arith.constant 0 : index
    %c128_18 = arith.constant 128 : index
    %25 = vector.load %arg3[%c0_17, %c128_18] : memref<128x256xf32, #tpu.memory_space<vmem>>, vector<128x128xf32>
    %cst_19 = arith.constant dense<0.000000e+00> : vector<2x128xf32>
    %26 = tpu.matmul %24, %25, %cst_19 {dimension_numbers = #tpu.dot_dimension_numbers<[1], [0], [0], [1], [0, 0, 1, 1], [], []>} : vector<2x128xf32>, vector<128x128xf32>, vector<2x128xf32> -> vector<2x128xf32>
    %c3 = arith.constant 3 : index
    %c0_20 = arith.constant 0 : index
    %27 = vector.load %arg4[%c3, %c0_20] : memref<4x128xf32, #tpu.memory_space<vmem>>, vector<1x128xf32>
    %28 = vector.broadcast %27 : vector<1x128xf32> to vector<2x128xf32>
    %29 = arith.addf %26, %28 : vector<2x128xf32>
    %30 = vector.shape_cast %29 : vector<2x128xf32> to vector<2x1x128xf32>
    %31 = vector.broadcast %30 : vector<2x1x128xf32> to vector<2x8x128xf32>
    %32 = arith.addf %14, %31 : vector<2x8x128xf32>
    %33 = vector.extract_strided_slice %32 {offsets = [0, 0, 0], sizes = [2, 8, 32], strides = [1, 1, 1]} : vector<2x8x128xf32> to vector<2x8x32xf32>
    %c0_21 = arith.constant 0 : index
    %c0_22 = arith.constant 0 : index
    %c0_23 = arith.constant 0 : index
    %34 = vector.load %arg5[%c0_21, %c0_22, %c0_23] : memref<2x8x32xf32, #tpu.memory_space<vmem>>, vector<2x8x32xf32>
    tpu.vector_store %arg5[%c0_21, %c0_22, %c0_23], %33 {strides = array<i32>} : memref<2x8x32xf32, #tpu.memory_space<vmem>>, vector<2x8x32xf32>,
    return
  }
  func.func @transform_0(%arg0: i32) -> (i32, i32, i32) {
    %c0_i32 = arith.constant 0 : i32
    %c0_i32_0 = arith.constant 0 : i32
    %c0_i32_1 = arith.constant 0 : i32
    return %arg0, %c0_i32, %c0_i32_0 : i32, i32, i32
  }
  func.func @transform_1(%arg0: i32) -> (i32, i32) {
    %c0_i32 = arith.constant 0 : i32
    %c0_i32_0 = arith.constant 0 : i32
    %c0_i32_1 = arith.constant 0 : i32
    return %c0_i32, %c0_i32_0 : i32, i32
  }
  func.func @transform_2(%arg0: i32) -> (i32, i32) {
    %c0_i32 = arith.constant 0 : i32
    %c0_i32_0 = arith.constant 0 : i32
    %c0_i32_1 = arith.constant 0 : i32
    return %c0_i32, %c0_i32_0 : i32, i32
  }
  func.func @transform_3(%arg0: i32) -> (i32, i32) {
    %c0_i32 = arith.constant 0 : i32
    %c0_i32_0 = arith.constant 0 : i32
    %c0_i32_1 = arith.constant 0 : i32
    return %c0_i32, %c0_i32_0 : i32, i32
  }
  func.func @transform_4(%arg0: i32) -> (i32, i32, i32) {
    %c0_i32 = arith.constant 0 : i32
    %c0_i32_0 = arith.constant 0 : i32
    %c0_i32_1 = arith.constant 0 : i32
    return %arg0, %c0_i32, %c0_i32_0 : i32, i32, i32
  }
}

module attributes {stable_mosaic.version = 11 : i64} {
  func.func @_equivariant_kernel(%arg0: i32, %arg1: memref<2x8x16xf32, #tpu.memory_space<vmem>>, %arg2: memref<16x256xf32, #tpu.memory_space<vmem>>, %arg3: memref<128x256xf32, #tpu.memory_space<vmem>>, %arg4: memref<4x128xf32, #tpu.memory_space<vmem>>, %arg5: memref<2x8x32xf32, #tpu.memory_space<vmem>>) attributes {dimension_semantics = [#tpu.dimension_semantics<parallel>], iteration_bounds = array<i64: 1>, scalar_prefetch = 0 : i64, scratch_operands = 0 : i64, tpu.core_type = #tpu.core_type<tc>, window_params = [{transform_indices = @transform_0, window_bounds = array<i64: 2, 8, 16>}, {pipeline_mode = #tpu.pipeline_mode<synchronous>, transform_indices = @transform_1, window_bounds = array<i64: 16, 256>}, {pipeline_mode = #tpu.pipeline_mode<synchronous>, transform_indices = @transform_2, window_bounds = array<i64: 128, 256>}, {pipeline_mode = #tpu.pipeline_mode<synchronous>, transform_indices = @transform_3, window_bounds = array<i64: 4, 128>}, {transform_indices = @transform_4, window_bounds = array<i64: 2, 8, 32>}]} {
    %c0 = arith.constant 0 : index
    %c0_0 = arith.constant 0 : index
    %c0_1 = arith.constant 0 : index
    %0 = vector.load %arg1[%c0, %c0_0, %c0_1] : memref<2x8x16xf32, #tpu.memory_space<vmem>>, vector<2x8x16xf32>
    %1 = vector.shape_cast %0 : vector<2x8x16xf32> to vector<16x16xf32>
    %c0_2 = arith.constant 0 : index
    %c0_3 = arith.constant 0 : index
    %2 = vector.load %arg2[%c0_2, %c0_3] : memref<16x256xf32, #tpu.memory_space<vmem>>, vector<16x128xf32>
    %cst = arith.constant dense<0.000000e+00> : vector<16x128xf32>
    %3 = tpu.matmul %1, %2, %cst {dimension_numbers = #tpu.dot_dimension_numbers<[1], [0], [0], [1], [0, 0, 1, 1], [], []>} : vector<16x16xf32>, vector<16x128xf32>, vector<16x128xf32> -> vector<16x128xf32>
    %c0_4 = arith.constant 0 : index
    %c0_5 = arith.constant 0 : index
    %4 = vector.load %arg4[%c0_4, %c0_5] : memref<4x128xf32, #tpu.memory_space<vmem>>, vector<1x128xf32>
    %5 = vector.broadcast %4 : vector<1x128xf32> to vector<16x128xf32>
    %6 = arith.addf %3, %5 : vector<16x128xf32>
    %cst_6 = arith.constant 0.000000e+00 : f32
    %7 = vector.broadcast %cst_6 : f32 to vector<16x128xf32>
    %8 = arith.maximumf %6, %7 : vector<16x128xf32>
    %c0_7 = arith.constant 0 : index
    %c0_8 = arith.constant 0 : index
    %9 = vector.load %arg3[%c0_7, %c0_8] : memref<128x256xf32, #tpu.memory_space<vmem>>, vector<128x128xf32>
    %cst_9 = arith.constant dense<0.000000e+00> : vector<16x128xf32>
    %10 = tpu.matmul %8, %9, %cst_9 {dimension_numbers = #tpu.dot_dimension_numbers<[1], [0], [0], [1], [0, 0, 1, 1], [], []>} : vector<16x128xf32>, vector<128x128xf32>, vector<16x128xf32> -> vector<16x128xf32>
    %c1 = arith.constant 1 : index
    %c0_10 = arith.constant 0 : index
    %11 = vector.load %arg4[%c1, %c0_10] : memref<4x128xf32, #tpu.memory_space<vmem>>, vector<1x128xf32>
    %12 = vector.broadcast %11 : vector<1x128xf32> to vector<16x128xf32>
    %13 = arith.addf %10, %12 : vector<16x128xf32>
    %14 = vector.shape_cast %13 : vector<16x128xf32> to vector<2x8x128xf32>
    %cst_11 = arith.constant dense<0.000000e+00> : vector<2x16xf32>
    %15 = vector.multi_reduction <add>, %0, %cst_11 [1] : vector<2x8x16xf32> to vector<2x16xf32>
    %cst_12 = arith.constant 1.250000e-01 : f32
    %16 = vector.broadcast %cst_12 : f32 to vector<2x16xf32>
    %17 = arith.mulf %15, %16 : vector<2x16xf32>
    %c0_13 = arith.constant 0 : index
    %c128 = arith.constant 128 : index
    %18 = vector.load %arg2[%c0_13, %c128] : memref<16x256xf32, #tpu.memory_space<vmem>>, vector<16x128xf32>
    %cst_14 = arith.constant dense<0.000000e+00> : vector<2x128xf32>
    %19 = tpu.matmul %17, %18, %cst_14 {dimension_numbers = #tpu.dot_dimension_numbers<[1], [0], [0], [1], [0, 0, 1, 1], [], []>} : vector<2x16xf32>, vector<16x128xf32>, vector<2x128xf32> -> vector<2x128xf32>
    %c2 = arith.constant 2 : index
    %c0_15 = arith.constant 0 : index
    %20 = vector.load %arg4[%c2, %c0_15] : memref<4x128xf32, #tpu.memory_space<vmem>>, vector<1x128xf32>
    %21 = vector.broadcast %20 : vector<1x128xf32> to vector<2x128xf32>
    %22 = arith.addf %19, %21 : vector<2x128xf32>
    %cst_16 = arith.constant 0.000000e+00 : f32
    %23 = vector.broadcast %cst_16 : f32 to vector<2x128xf32>
    %24 = arith.maximumf %22, %23 : vector<2x128xf32>
    %c0_17 = arith.constant 0 : index
    %c128_18 = arith.constant 128 : index
    %25 = vector.load %arg3[%c0_17, %c128_18] : memref<128x256xf32, #tpu.memory_space<vmem>>, vector<128x128xf32>
    %cst_19 = arith.constant dense<0.000000e+00> : vector<2x128xf32>
    %26 = tpu.matmul %24, %25, %cst_19 {dimension_numbers = #tpu.dot_dimension_numbers<[1], [0], [0], [1], [0, 0, 1, 1], [], []>} : vector<2x128xf32>, vector<128x128xf32>, vector<2x128xf32> -> vector<2x128xf32>
    %c3 = arith.constant 3 : index
    %c0_20 = arith.constant 0 : index
    %27 = vector.load %arg4[%c3, %c0_20] : memref<4x128xf32, #tpu.memory_space<vmem>>, vector<1x128xf32>
    %28 = vector.broadcast %27 : vector<1x128xf32> to vector<2x128xf32>
    %29 = arith.addf %26, %28 : vector<2x128xf32>
    %30 = vector.shape_cast %29 : vector<2x128xf32> to vector<2x1x128xf32>
    %31 = vector.broadcast %30 : vector<2x1x128xf32> to vector<2x8x128xf32>
    %32 = arith.addf %14, %31 : vector<2x8x128xf32>
    %33 = vector.extract_strided_slice %32 {offsets = [0, 0, 0], sizes = [2, 8, 32], strides = [1, 1, 1]} : vector<2x8x128xf32> to vector<2x8x32xf32>
    %c0_21 = arith.constant 0 : index
    %c0_22 = arith.constant 0 : index
    %c0_23 = arith.constant 0 : index
    %34 = vector.load %arg5[%c0_21, %c0_22, %c0_23] : memref<2x8x32xf32, #tpu.memory_space<vmem>>, vector<2x8x32xf32>
    tpu.vector_store %arg5[%c0_21, %c0_22, %c0_23], %33 {strides = array<i32>} : memref<2x8x32xf32, #tpu.memory_space<vmem>>, vector<2x8x32xf32>,
    return
  }
  func.func @transform_0(%arg0: i32) -> (i32, i32, i32) {
    %c0_i32 = arith.constant 0 : i32
    %c0_i32_0 = arith.constant 0 : i32
    %c0_i32_1 = arith.constant 0 : i32
    return %arg0, %c0_i32, %c0_i32_0 : i32, i32, i32
  }
  func.func @transform_1(%arg0: i32) -> (i32, i32) {
    %c0_i32 = arith.constant 0 : i32
    %c0_i32_0 = arith.constant 0 : i32
    %c0_i32_1 = arith.constant 0 : i32
    return %c0_i32, %c0_i32_0 : i32, i32
  }
  func.func @transform_2(%arg0: i32) -> (i32, i32) {
    %c0_i32 = arith.constant 0 : i32
    %c0_i32_0 = arith.constant 0 : i32
    %c0_i32_1 = arith.constant 0 : i32
    return %c0_i32, %c0_i32_0 : i32, i32
  }
  func.func @transform_3(%arg0: i32) -> (i32, i32) {
    %c0_i32 = arith.constant 0 : i32
    %c0_i32_0 = arith.constant 0 : i32
    %c0_i32_1 = arith.constant 0 : i32
    return %c0_i32, %c0_i32_0 : i32, i32
  }
  func.func @transform_4(%arg0: i32) -> (i32, i32, i32) {
    %c0_i32 = arith.constant 0 : i32
    %c0_i32_0 = arith.constant 0 : i32
    %c0_i32_1 = arith.constant 0 : i32
    return %arg0, %c0_i32, %c0_i32_0 : i32, i32, i32
  }
}

</mosaic_0001>

<llo_original>
// kernel: tpu_custom_call.1
$region0: #{tpu_custom_call.1}
  #allocation0 [shape = 'u32[]', space=smem, size = 0x4, offset = 0x4, fixed_abs, tag = 'smem constant byte address 0x4 - core index']
  #allocation1 [shape = 'u32[144,128]{1,0:T(1,128)}', space=vmem, size = 0x12000, scoped, tag = 'internal scratch']
  %s0 = inlined_call_operand.hbm [shape: f32[2,8,16], index: 0, kind: input, shape index: {}]
  %s1 = inlined_call_operand.hbm [shape: f32[16,256], index: 1, kind: input, shape index: {}]
  %s2 = inlined_call_operand.hbm [shape: f32[128,256], index: 2, kind: input, shape index: {}]
  %s3 = inlined_call_operand.vmem [shape: f32[4,128], index: 3, kind: input, shape index: {}]
  %s4 = inlined_call_operand.hbm [shape: f32[2,8,32], index: 4, kind: output, shape index: {}]
  %s5 = sld [smem:[#allocation0]]
  $region38: #{tpu_custom_call.1} parent=0
    _
  %s7 = ssub.s32 1, %s5
  %s8 = scalar_select 0, %s7, %s5
  $region1: #{tpu_custom_call.1} parent=0
    #allocation2 [shape = 'u8[8192]{0}', space=vmem, size = 0x2000, scoped, tag = 'input window, operand 0, single buffered']
    #allocation3 [shape = 's32[1]{0}', space=sflag, size = 0x4, scoped, tag = 'scoped memory for tpu_custom_call.1']
    #allocation4 [shape = 's32[1]{0}', space=sflag, size = 0x4, scoped, tag = 'scoped memory for tpu_custom_call.1']
    #allocation5 [shape = 'u8[16384]{0}', space=vmem, size = 0x4000, scoped, tag = 'input window, operand 1, single buffered']
    #allocation6 [shape = 's32[1]{0}', space=sflag, size = 0x4, scoped, tag = 'scoped memory for tpu_custom_call.1']
    #allocation7 [shape = 'u8[131072]{0}', space=vmem, size = 0x20000, scoped, tag = 'input window, operand 2, single buffered']
    #allocation8 [shape = 'u8[8192]{0}', space=vmem, size = 0x2000, scoped, tag = 'output window, operand 0, single buffered']
    %9 = vsyncpa [#allocation3], 0
    %10 = vsyncpa [#allocation6], 0
    %11 = vsyncpa [#allocation4], 0
    // Predicated region
    $region2: #{tpu_custom_call.1} parent=1 // pred_check
      _
    $region3: #{tpu_custom_call.1} parent=1 // pred_check_branch
      %13 = sbr.rel (0) target = $region5
    $region4: #{tpu_custom_call.1} parent=1 // pred_region
      %s15 = ssub.s32 256, 256
      %16 = vsyncadd [#allocation3], %s15
      %s17 = sshll.u32 [#allocation2], 4
      %s18 = int_to_ptr.vmem [resolvable:$true] %s17
      %23 = dma.hbm_to_vmem [thread:$0]  %s0, 256, %s18, [#allocation3], 128, 128, 8
    $region5: #{tpu_custom_call.1} parent=1 // pred_fallthru
      _
    // Predicated region
    $region6: #{tpu_custom_call.1} parent=1 // pred_check
      _
    $region7: #{tpu_custom_call.1} parent=1 // pred_check_branch
      %25 = sbr.rel (0) target = $region9
    $region8: #{tpu_custom_call.1} parent=1 // pred_region
      %s27 = ssub.s32 512, 512
      %28 = vsyncadd [#allocation6], %s27
      %s29 = sshll.u32 [#allocation5], 4
      %s30 = int_to_ptr.vmem [resolvable:$true] %s29
      %35 = dma.hbm_to_vmem [thread:$0]  %s1, 512, %s30, [#allocation6], 256, 256, 16
    $region9: #{tpu_custom_call.1} parent=1 // pred_fallthru
      _
    // Predicated region
    $region10: #{tpu_custom_call.1} parent=1 // pred_check
      _
    $region11: #{tpu_custom_call.1} parent=1 // pred_check_branch
      %37 = sbr.rel (0) target = $region13
    $region12: #{tpu_custom_call.1} parent=1 // pred_region
      %s39 = ssub.s32 4096, 4096
      %40 = vsyncadd [#allocation6], %s39
      %s41 = sshll.u32 [#allocation7], 4
      %s42 = int_to_ptr.vmem [resolvable:$true] %s41
      %47 = dma.hbm_to_vmem [thread:$0]  %s2, 4096, %s42, [#allocation6], 256, 256, 16
    $region13: #{tpu_custom_call.1} parent=1 // pred_fallthru
      _
    // Predicated region
    $region14: #{tpu_custom_call.1} parent=1 // pred_check
      _
    $region15: #{tpu_custom_call.1} parent=1 // pred_check_branch
      %49 = sbr.rel (0) target = $region17
    $region16: #{tpu_custom_call.1} parent=1 // pred_region
      _
    $region17: #{tpu_custom_call.1} parent=1 // pred_fallthru
      _
    // Predicated region
    $region18: #{tpu_custom_call.1} parent=1 // pred_check
      _
    $region19: #{tpu_custom_call.1} parent=1 // pred_check_branch
      %51 = sbr.rel (0) target = $region21
    $region20: #{tpu_custom_call.1} parent=1 // pred_region
      %52 = dma.done [#allocation3], 256
    $region21: #{tpu_custom_call.1} parent=1 // pred_fallthru
      _
    // Predicated region
    $region22: #{tpu_custom_call.1} parent=1 // pred_check
      _
    $region23: #{tpu_custom_call.1} parent=1 // pred_check_branch
      %54 = sbr.rel (0) target = $region25
    $region24: #{tpu_custom_call.1} parent=1 // pred_region
      %55 = dma.done [#allocation6], 512
    $region25: #{tpu_custom_call.1} parent=1 // pred_fallthru
      _
    // Predicated region
    $region26: #{tpu_custom_call.1} parent=1 // pred_check
      _
    $region27: #{tpu_custom_call.1} parent=1 // pred_check_branch
      %57 = sbr.rel (0) target = $region29
    $region28: #{tpu_custom_call.1} parent=1 // pred_region
      %58 = dma.done [#allocation6], 4096
    $region29: #{tpu_custom_call.1} parent=1 // pred_fallthru
      _
    %v59 = vld [vmem:[#allocation2] sm:$0xff]
    %v60 = vld [vmem:[#allocation2 + $0x8] sm:$0xff]
    %v61 = vld [vmem:[#allocation5] sm:$0xff]
    %v62 = vld [vmem:[#allocation5 + $0x10] sm:$0xff]
    %v63 = vld [vmem:[%s3] sm:$0x1]
    %v64 = vlaneseq
    %v65 = vshrl.u32 %v64, 7
    %v66 = vsub.s32 0, %v65
    %v67 = vrot.slane %v63, %v66
    %vm68 = vcmask 130048
    %v70 = vsel %vm68, %v59, 0
    %v73 = vsel %vm68, %v60, 0
    %75 = vmatprep.subr.mxu0 0.0
    %76 = vmatpush1.msra.mxu0 0.0
    %77 = vmatprep.subr.mxu0 0.0
    %78 = vmatpush1.msra.mxu0 0.0
    %79 = vmatprep.subr.mxu0 0.0
    %80 = vmatpush1.msra.mxu0 0.0
    %81 = vmatprep.subr.mxu0 0.0
    %82 = vmatpush1.msra.mxu0 0.0
    %83 = vmatprep.subr.mxu0 0.0
    %84 = vmatpush1.msra.mxu0 0.0
    %85 = vmatprep.subr.mxu0 0.0
    %86 = vmatpush1.msra.mxu0 0.0
    %87 = vmatprep.subr.mxu0 0.0
    %88 = vmatpush1.msra.mxu0 0.0
    %89 = vmatprep.subr.mxu0 0.0
    %90 = vmatpush1.msra.mxu0 0.0
    %91 = vmatprep.subr.mxu0 0.0
    %92 = vmatpush1.msra.mxu0 0.0
    %93 = vmatprep.subr.mxu0 0.0
    %94 = vmatpush1.msra.mxu0 0.0
    %95 = vmatprep.subr.mxu0 0.0
    %96 = vmatpush1.msra.mxu0 0.0
    %97 = vmatprep.subr.mxu0 0.0
    %98 = vmatpush1.msra.mxu0 0.0
    %99 = vmatprep.subr.mxu0 0.0
    %100 = vmatpush1.msra.mxu0 0.0
    %101 = vmatprep.subr.mxu0 0.0
    %102 = vmatpush1.msra.mxu0 0.0
    %103 = vmatprep.subr.mxu0 0.0
    %104 = vmatpush1.msra.mxu0 %v62
    %105 = vmatprep.subr.mxu0 0.0
    %106 = vmatpush1.msra.mxu0 %v61
    %107 = vmatprep.subr.mxu0 0.0
    %108 = vmatpush2.msra.mxu0 0.0
    %109 = vmatprep.subr.mxu0 0.0
    %110 = vmatpush2.msra.mxu0 0.0
    %111 = vmatprep.subr.mxu0 0.0
    %112 = vmatpush2.msra.mxu0 0.0
    %113 = vmatprep.subr.mxu0 0.0
    %114 = vmatpush2.msra.mxu0 0.0
    %115 = vmatprep.subr.mxu0 0.0
    %116 = vmatpush2.msra.mxu0 0.0
    %117 = vmatprep.subr.mxu0 0.0
    %118 = vmatpush2.msra.mxu0 0.0
    %119 = vmatprep.subr.mxu0 0.0
    %120 = vmatpush2.msra.mxu0 0.0
    %121 = vmatprep.subr.mxu0 0.0
    %122 = vmatpush2.msra.mxu0 0.0
    %123 = vmatprep.subr.mxu0 0.0
    %124 = vmatpush2.msra.mxu0 0.0
    %125 = vmatprep.subr.mxu0 0.0
    %126 = vmatpush2.msra.mxu0 0.0
    %127 = vmatprep.subr.mxu0 0.0
    %128 = vmatpush2.msra.mxu0 0.0
    %129 = vmatprep.subr.mxu0 0.0
    %130 = vmatpush2.msra.mxu0 0.0
    %131 = vmatprep.subr.mxu0 0.0
    %132 = vmatpush2.msra.mxu0 0.0
    %133 = vmatprep.subr.mxu0 0.0
    %134 = vmatpush2.msra.mxu0 0.0
    %135 = vmatprep.subr.mxu0 0.0
    %136 = vmatpush2.msra.mxu0 0.0
    %137 = vmatprep.subr.mxu0 0.0
    %138 = vmatpush2.msra.mxu0 0.0
    %139 = vmatprep.mubr.f32.mxu0 0.0
    %140 = vmatmul.mubr.f32.gmra.mxu0 %v70
    %v141 = vpop.f32.mrf.mxu0
    %v142 = vadd.f32 %v67, %v141
    %v143 = vpop.f32.mrf.mxu0
    %144 = vmatprep.mubr.f32.mxu0 0.0
    %145 = vmatmul.mubr.f32.gmra.mxu0 %v73
    %v146 = vpop.f32.mrf.mxu0
    %v147 = vadd.f32 %v67, %v146
    %v148 = vpop.f32.mrf.mxu0
    %149 = vdwg.mxu0
    %v150 = vmax.f32 %v142, 0.0
    %v151 = vmax.f32 %v147, 0.0
    %v152 = vld [vmem:[#allocation7] sm:$0xff]
    %v153 = vld [vmem:[#allocation7 + $0x10] sm:$0xff]
    %v154 = vld [vmem:[#allocation7 + $0x20] sm:$0xff]
    %v155 = vld [vmem:[#allocation7 + $0x30] sm:$0xff]
    %v156 = vld [vmem:[#allocation7 + $0x40] sm:$0xff]
    %v157 = vld [vmem:[#allocation7 + $0x50] sm:$0xff]
    %v158 = vld [vmem:[#allocation7 + $0x60] sm:$0xff]
    %v159 = vld [vmem:[#allocation7 + $0x70] sm:$0xff]
    %v160 = vld [vmem:[#allocation7 + $0x80] sm:$0xff]
    %v161 = vld [vmem:[#allocation7 + $0x90] sm:$0xff]
    %v162 = vld [vmem:[#allocation7 + $0xa0] sm:$0xff]
    %v163 = vld [vmem:[#allocation7 + $0xb0] sm:$0xff]
    %v164 = vld [vmem:[#allocation7 + $0xc0] sm:$0xff]
    %v165 = vld [vmem:[#allocation7 + $0xd0] sm:$0xff]
    %v166 = vld [vmem:[#allocation7 + $0xe0] sm:$0xff]
    %v167 = vld [vmem:[#allocation7 + $0xf0] sm:$0xff]
    %v168 = vld [vmem:[%s3 + $0x1] sm:$0x1]
    %v169 = vlaneseq
    %v170 = vshrl.u32 %v169, 7
    %v171 = vsub.s32 0, %v170
    %v172 = vrot.slane %v168, %v171
    %173 = vmatprep.subr.mxu0 0.0
    %174 = vmatpush1.msra.mxu0 %v167
    %175 = vmatprep.subr.mxu0 0.0
    %176 = vmatpush1.msra.mxu0 %v166
    %177 = vmatprep.subr.mxu0 0.0
    %178 = vmatpush1.msra.mxu0 %v165
    %179 = vmatprep.subr.mxu0 0.0
    %180 = vmatpush1.msra.mxu0 %v164
    %181 = vmatprep.subr.mxu0 0.0
    %182 = vmatpush1.msra.mxu0 %v163
    %183 = vmatprep.subr.mxu0 0.0
    %184 = vmatpush1.msra.mxu0 %v162
    %185 = vmatprep.subr.mxu0 0.0
    %186 = vmatpush1.msra.mxu0 %v161
    %187 = vmatprep.subr.mxu0 0.0
    %188 = vmatpush1.msra.mxu0 %v160
    %189 = vmatprep.subr.mxu0 0.0
    %190 = vmatpush1.msra.mxu0 %v159
    %191 = vmatprep.subr.mxu0 0.0
    %192 = vmatpush1.msra.mxu0 %v158
    %193 = vmatprep.subr.mxu0 0.0
    %194 = vmatpush1.msra.mxu0 %v157
    %195 = vmatprep.subr.mxu0 0.0
    %196 = vmatpush1.msra.mxu0 %v156
    %197 = vmatprep.subr.mxu0 0.0
    %198 = vmatpush1.msra.mxu0 %v155
    %199 = vmatprep.subr.mxu0 0.0
    %200 = vmatpush1.msra.mxu0 %v154
    %201 = vmatprep.subr.mxu0 0.0
    %202 = vmatpush1.msra.mxu0 %v153
    %203 = vmatprep.subr.mxu0 0.0
    %204 = vmatpush1.msra.mxu0 %v152
    %205 = vmatprep.subr.mxu0 0.0
    %206 = vmatpush2.msra.mxu0 0.0
    %207 = vmatprep.subr.mxu0 0.0
    %208 = vmatpush2.msra.mxu0 0.0
    %209 = vmatprep.subr.mxu0 0.0
    %210 = vmatpush2.msra.mxu0 0.0
    %211 = vmatprep.subr.mxu0 0.0
    %212 = vmatpush2.msra.mxu0 0.0
    %213 = vmatprep.subr.mxu0 0.0
    %214 = vmatpush2.msra.mxu0 0.0
    %215 = vmatprep.subr.mxu0 0.0
    %216 = vmatpush2.msra.mxu0 0.0
    %217 = vmatprep.subr.mxu0 0.0
    %218 = vmatpush2.msra.mxu0 0.0
    %219 = vmatprep.subr.mxu0 0.0
    %220 = vmatpush2.msra.mxu0 0.0
    %221 = vmatprep.subr.mxu0 0.0
    %222 = vmatpush2.msra.mxu0 0.0
    %223 = vmatprep.subr.mxu0 0.0
    %224 = vmatpush2.msra.mxu0 0.0
    %225 = vmatprep.subr.mxu0 0.0
    %226 = vmatpush2.msra.mxu0 0.0
    %227 = vmatprep.subr.mxu0 0.0
    %228 = vmatpush2.msra.mxu0 0.0
    %229 = vmatprep.subr.mxu0 0.0
    %230 = vmatpush2.msra.mxu0 0.0
    %231 = vmatprep.subr.mxu0 0.0
    %232 = vmatpush2.msra.mxu0 0.0
    %233 = vmatprep.subr.mxu0 0.0
    %234 = vmatpush2.msra.mxu0 0.0
    %235 = vmatprep.subr.mxu0 0.0
    %236 = vmatpush2.msra.mxu0 0.0
    %237 = vmatprep.mubr.f32.mxu0 0.0
    %238 = vmatmul.mubr.f32.gmra.mxu0 %v150
    %v239 = vpop.f32.mrf.mxu0
    %v240 = vadd.f32 %v172, %v239
    %v241 = vpop.f32.mrf.mxu0
    %242 = vmatprep.mubr.f32.mxu0 0.0
    %243 = vmatmul.mubr.f32.gmra.mxu0 %v151
    %v244 = vpop.f32.mrf.mxu0
    %v245 = vadd.f32 %v172, %v244
    %v246 = vpop.f32.mrf.mxu0
    %247 = vdwg.mxu0
    %v248 = vsel %vm68, %v59, 0.0
    %v249 = vrot.slane %v248, 4
    %v250 = vadd.f32 %v248, %v249
    %v251 = vrot.slane %v250, 2
    %v252 = vadd.f32 %v250, %v251
    %v253 = vrot.slane %v252, 1
    %v254 = vadd.f32 %v252, %v253
    %v255 = vsel %vm68, %v60, 0.0
    %v256 = vrot.slane %v255, 4
    %v257 = vadd.f32 %v255, %v256
    %v258 = vrot.slane %v257, 2
    %v259 = vadd.f32 %v257, %v258
    %v260 = vrot.slane %v259, 1
    %v261 = vadd.f32 %v259, %v260
    %v262 = vmul.f32 %v254, 0.125
    %v263 = vmul.f32 %v261, 0.125
    %v264 = vld [vmem:[#allocation5 + $0x8] sm:$0xff]
    %v265 = vld [vmem:[#allocation5 + $0x18] sm:$0xff]
    %v266 = vld [vmem:[%s3 + $0x2] sm:$0x1]
    %v267 = vlaneseq
    %v268 = vshrl.u32 %v267, 7
    %v269 = vsub.s32 0, %v268
    %v270 = vrot.slane %v266, %v269
    %vm273 = vcmask 1041409
    %v274 = vsel %vm273, %v263, %v262
    %v275 = vsel %vm68, %v274, 0
    %277 = vmatprep.subr.mxu0 0.0
    %278 = vmatpush1.msra.mxu0 0.0
    %279 = vmatprep.subr.mxu0 0.0
    %280 = vmatpush1.msra.mxu0 0.0
    %281 = vmatprep.subr.mxu0 0.0
    %282 = vmatpush1.msra.mxu0 0.0
    %283 = vmatprep.subr.mxu0 0.0
    %284 = vmatpush1.msra.mxu0 0.0
    %285 = vmatprep.subr.mxu0 0.0
    %286 = vmatpush1.msra.mxu0 0.0
    %287 = vmatprep.subr.mxu0 0.0
    %288 = vmatpush1.msra.mxu0 0.0
    %289 = vmatprep.subr.mxu0 0.0
    %290 = vmatpush1.msra.mxu0 0.0
    %291 = vmatprep.subr.mxu0 0.0
    %292 = vmatpush1.msra.mxu0 0.0
    %293 = vmatprep.subr.mxu0 0.0
    %294 = vmatpush1.msra.mxu0 0.0
    %295 = vmatprep.subr.mxu0 0.0
    %296 = vmatpush1.msra.mxu0 0.0
    %297 = vmatprep.subr.mxu0 0.0
    %298 = vmatpush1.msra.mxu0 0.0
    %299 = vmatprep.subr.mxu0 0.0
    %300 = vmatpush1.msra.mxu0 0.0
    %301 = vmatprep.subr.mxu0 0.0
    %302 = vmatpush1.msra.mxu0 0.0
    %303 = vmatprep.subr.mxu0 0.0
    %304 = vmatpush1.msra.mxu0 0.0
    %305 = vmatprep.subr.mxu0 0.0
    %306 = vmatpush1.msra.mxu0 %v265
    %307 = vmatprep.subr.mxu0 0.0
    %308 = vmatpush1.msra.mxu0 %v264
    %309 = vmatprep.subr.mxu0 0.0
    %310 = vmatpush2.msra.mxu0 0.0
    %311 = vmatprep.subr.mxu0 0.0
    %312 = vmatpush2.msra.mxu0 0.0
    %313 = vmatprep.subr.mxu0 0.0
    %314 = vmatpush2.msra.mxu0 0.0
    %315 = vmatprep.subr.mxu0 0.0
    %316 = vmatpush2.msra.mxu0 0.0
    %317 = vmatprep.subr.mxu0 0.0
    %318 = vmatpush2.msra.mxu0 0.0
    %319 = vmatprep.subr.mxu0 0.0
    %320 = vmatpush2.msra.mxu0 0.0
    %321 = vmatprep.subr.mxu0 0.0
    %322 = vmatpush2.msra.mxu0 0.0
    %323 = vmatprep.subr.mxu0 0.0
    %324 = vmatpush2.msra.mxu0 0.0
    %325 = vmatprep.subr.mxu0 0.0
    %326 = vmatpush2.msra.mxu0 0.0
    %327 = vmatprep.subr.mxu0 0.0
    %328 = vmatpush2.msra.mxu0 0.0
    %329 = vmatprep.subr.mxu0 0.0
    %330 = vmatpush2.msra.mxu0 0.0
    %331 = vmatprep.subr.mxu0 0.0
    %332 = vmatpush2.msra.mxu0 0.0
    %333 = vmatprep.subr.mxu0 0.0
    %334 = vmatpush2.msra.mxu0 0.0
    %335 = vmatprep.subr.mxu0 0.0
    %336 = vmatpush2.msra.mxu0 0.0
    %337 = vmatprep.subr.mxu0 0.0
    %338 = vmatpush2.msra.mxu0 0.0
    %339 = vmatprep.subr.mxu0 0.0
    %340 = vmatpush2.msra.mxu0 0.0
    %341 = vmatprep.mubr.f32.mxu0 0.0
    %342 = vmatmul.mubr.f32.gmra.mxu0 %v275
    %v343 = vpop.f32.mrf.mxu0
    %v344 = vadd.f32 %v270, %v343
    %v345 = vpop.f32.mrf.mxu0
    %346 = vdwg.mxu0
    %v347 = vmax.f32 %v344, 0.0
    %v348 = vld [vmem:[#allocation7 + $0x8] sm:$0xff]
    %v349 = vld [vmem:[#allocation7 + $0x18] sm:$0xff]
    %v350 = vld [vmem:[#allocation7 + $0x28] sm:$0xff]
    %v351 = vld [vmem:[#allocation7 + $0x38] sm:$0xff]
    %v352 = vld [vmem:[#allocation7 + $0x48] sm:$0xff]
    %v353 = vld [vmem:[#allocation7 + $0x58] sm:$0xff]
    %v354 = vld [vmem:[#allocation7 + $0x68] sm:$0xff]
    %v355 = vld [vmem:[#allocation7 + $0x78] sm:$0xff]
    %v356 = vld [vmem:[#allocation7 + $0x88] sm:$0xff]
    %v357 = vld [vmem:[#allocation7 + $0x98] sm:$0xff]
    %v358 = vld [vmem:[#allocation7 + $0xa8] sm:$0xff]
    %v359 = vld [vmem:[#allocation7 + $0xb8] sm:$0xff]
    %v360 = vld [vmem:[#allocation7 + $0xc8] sm:$0xff]
    %v361 = vld [vmem:[#allocation7 + $0xd8] sm:$0xff]
    %v362 = vld [vmem:[#allocation7 + $0xe8] sm:$0xff]
    %v363 = vld [vmem:[#allocation7 + $0xf8] sm:$0xff]
    %v364 = vld [vmem:[%s3 + $0x3] sm:$0x1]
    %v365 = vlaneseq
    %v366 = vshrl.u32 %v365, 7
    %v367 = vsub.s32 0, %v366
    %v368 = vrot.slane %v364, %v367
    %369 = vmatprep.subr.mxu0 0.0
    %370 = vmatpush1.msra.mxu0 %v363
    %371 = vmatprep.subr.mxu0 0.0
    %372 = vmatpush1.msra.mxu0 %v362
    %373 = vmatprep.subr.mxu0 0.0
    %374 = vmatpush1.msra.mxu0 %v361
    %375 = vmatprep.subr.mxu0 0.0
    %376 = vmatpush1.msra.mxu0 %v360
    %377 = vmatprep.subr.mxu0 0.0
    %378 = vmatpush1.msra.mxu0 %v359
    %379 = vmatprep.subr.mxu0 0.0
    %380 = vmatpush1.msra.mxu0 %v358
    %381 = vmatprep.subr.mxu0 0.0
    %382 = vmatpush1.msra.mxu0 %v357
    %383 = vmatprep.subr.mxu0 0.0
    %384 = vmatpush1.msra.mxu0 %v356
    %385 = vmatprep.subr.mxu0 0.0
    %386 = vmatpush1.msra.mxu0 %v355
    %387 = vmatprep.subr.mxu0 0.0
    %388 = vmatpush1.msra.mxu0 %v354
    %389 = vmatprep.subr.mxu0 0.0
    %390 = vmatpush1.msra.mxu0 %v353
    %391 = vmatprep.subr.mxu0 0.0
    %392 = vmatpush1.msra.mxu0 %v352
    %393 = vmatprep.subr.mxu0 0.0
    %394 = vmatpush1.msra.mxu0 %v351
    %395 = vmatprep.subr.mxu0 0.0
    %396 = vmatpush1.msra.mxu0 %v350
    %397 = vmatprep.subr.mxu0 0.0
    %398 = vmatpush1.msra.mxu0 %v349
    %399 = vmatprep.subr.mxu0 0.0
    %400 = vmatpush1.msra.mxu0 %v348
    %401 = vmatprep.subr.mxu0 0.0
    %402 = vmatpush2.msra.mxu0 0.0
    %403 = vmatprep.subr.mxu0 0.0
    %404 = vmatpush2.msra.mxu0 0.0
    %405 = vmatprep.subr.mxu0 0.0
    %406 = vmatpush2.msra.mxu0 0.0
    %407 = vmatprep.subr.mxu0 0.0
    %408 = vmatpush2.msra.mxu0 0.0
    %409 = vmatprep.subr.mxu0 0.0
    %410 = vmatpush2.msra.mxu0 0.0
    %411 = vmatprep.subr.mxu0 0.0
    %412 = vmatpush2.msra.mxu0 0.0
    %413 = vmatprep.subr.mxu0 0.0
    %414 = vmatpush2.msra.mxu0 0.0
    %415 = vmatprep.subr.mxu0 0.0
    %416 = vmatpush2.msra.mxu0 0.0
    %417 = vmatprep.subr.mxu0 0.0
    %418 = vmatpush2.msra.mxu0 0.0
    %419 = vmatprep.subr.mxu0 0.0
    %420 = vmatpush2.msra.mxu0 0.0
    %421 = vmatprep.subr.mxu0 0.0
    %422 = vmatpush2.msra.mxu0 0.0
    %423 = vmatprep.subr.mxu0 0.0
    %424 = vmatpush2.msra.mxu0 0.0
    %425 = vmatprep.subr.mxu0 0.0
    %426 = vmatpush2.msra.mxu0 0.0
    %427 = vmatprep.subr.mxu0 0.0
    %428 = vmatpush2.msra.mxu0 0.0
    %429 = vmatprep.subr.mxu0 0.0
    %430 = vmatpush2.msra.mxu0 0.0
    %431 = vmatprep.subr.mxu0 0.0
    %432 = vmatpush2.msra.mxu0 0.0
    %433 = vmatprep.mubr.f32.mxu0 0.0
    %434 = vmatmul.mubr.f32.gmra.mxu0 %v347
    %v435 = vpop.f32.mrf.mxu0
    %v436 = vadd.f32 %v368, %v435
    %v437 = vpop.f32.mrf.mxu0
    %438 = vdwg.mxu0
    %v441 = vunpack.c.l.s4 1966171168
    %v442 = vunpack.c.0.s8 %v441
    %v443 = vlaneseq
    %v444 = vshrl.u32 %v443, 7
    %v445 = vsub.s32 %v442, %v444
    %v446 = vrot.slane %v436, %v445
    %v447 = vcombine.high %v446, %v446
    %v449 = vunpack.c.l.s4 1966171168
    %v450 = vunpack.c.0.s8 %v449
    %v451 = vlaneseq
    %v452 = vshrl.u32 %v451, 7
    %v453 = vsub.s32 %v450, %v452
    %v454 = vrot.slane %v446, %v453
    %v456 = vunpack.c.l.s4 1966171168
    %v457 = vunpack.c.0.s8 %v456
    %v458 = vlaneseq
    %v459 = vshrl.u32 %v458, 7
    %v460 = vsub.s32 %v457, %v459
    %v461 = vrot.slane %v447, %v460
    %v462 = vlaneseq
    %v463 = vshrl.u32 %v462, 7
    %v464 = vsub.s32 0, %v463
    %v465 = vrot.slane %v454, %v464
    %v466 = vlaneseq
    %v467 = vshrl.u32 %v466, 7
    %v468 = vsub.s32 0, %v467
    %v469 = vrot.slane %v461, %v468
    %v472 = vadd.f32 %v240, %v465
    %v473 = vadd.f32 %v245, %v469
    %vm474 = vcmask 261120
    %475 = vst.msk [vmem:[#allocation8] sm:$0xff] %vm474, %v472
    %476 = vst.msk [vmem:[#allocation8 + $0x8] sm:$0xff] %vm474, %v473
    // Predicated region
    $region30: #{tpu_custom_call.1} parent=1 // pred_check
      _
    $region31: #{tpu_custom_call.1} parent=1 // pred_check_branch
      %478 = sbr.rel (0) target = $region33
    $region32: #{tpu_custom_call.1} parent=1 // pred_region
      %s480 = ssub.s32 256, 256
      %481 = vsyncadd [#allocation4], %s480
      %s482 = sshll.u32 [#allocation8], 4
      %s483 = int_to_ptr.vmem [resolvable:$true] %s482
      %488 = dma.vmem_to_hbm [thread:$0]  %s483, 256, %s4, [#allocation4], 128, 128, 8
    $region33: #{tpu_custom_call.1} parent=1 // pred_fallthru
      _
    // Predicated region
    $region34: #{tpu_custom_call.1} parent=1 // pred_check
      _
    $region35: #{tpu_custom_call.1} parent=1 // pred_check_branch
      %490 = sbr.rel (0) target = $region37
    $region36: #{tpu_custom_call.1} parent=1 // pred_region
      %491 = dma.done [#allocation4], 256
    $region37: #{tpu_custom_call.1} parent=1 // pred_fallthru
      _
    %492 = vsyncpa [#allocation3], 1
    %493 = vsyncpa [#allocation6], 1
    %494 = vsyncpa [#allocation4], 1

// kernel: tpu_custom_call.1
$region0: #{tpu_custom_call.1}
  #allocation0 [shape = 'u32[]', space=smem, size = 0x4, offset = 0x4, fixed_abs, tag = 'smem constant byte address 0x4 - core index']
  #allocation1 [shape = 'u32[144,128]{1,0:T(1,128)}', space=vmem, size = 0x12000, scoped, tag = 'internal scratch']
  %s0 = inlined_call_operand.hbm [shape: f32[2,8,16], index: 0, kind: input, shape index: {}]
  %s1 = inlined_call_operand.hbm [shape: f32[16,256], index: 1, kind: input, shape index: {}]
  %s2 = inlined_call_operand.hbm [shape: f32[128,256], index: 2, kind: input, shape index: {}]
  %s3 = inlined_call_operand.vmem [shape: f32[4,128], index: 3, kind: input, shape index: {}]
  %s4 = inlined_call_operand.hbm [shape: f32[2,8,32], index: 4, kind: output, shape index: {}]
  %s5 = sld [smem:[#allocation0]]
  $region38: #{tpu_custom_call.1} parent=0
    _
  %s7 = ssub.s32 1, %s5
  %s8 = scalar_select 0, %s7, %s5
  $region1: #{tpu_custom_call.1} parent=0
    #allocation2 [shape = 'u8[8192]{0}', space=vmem, size = 0x2000, scoped, tag = 'input window, operand 0, single buffered']
    #allocation3 [shape = 's32[1]{0}', space=sflag, size = 0x4, scoped, tag = 'scoped memory for tpu_custom_call.1']
    #allocation4 [shape = 's32[1]{0}', space=sflag, size = 0x4, scoped, tag = 'scoped memory for tpu_custom_call.1']
    #allocation5 [shape = 'u8[16384]{0}', space=vmem, size = 0x4000, scoped, tag = 'input window, operand 1, single buffered']
    #allocation6 [shape = 's32[1]{0}', space=sflag, size = 0x4, scoped, tag = 'scoped memory for tpu_custom_call.1']
    #allocation7 [shape = 'u8[131072]{0}', space=vmem, size = 0x20000, scoped, tag = 'input window, operand 2, single buffered']
    #allocation8 [shape = 'u8[8192]{0}', space=vmem, size = 0x2000, scoped, tag = 'output window, operand 0, single buffered']
    %9 = vsyncpa [#allocation3], 0
    %10 = vsyncpa [#allocation6], 0
    %11 = vsyncpa [#allocation4], 0
    // Predicated region
    $region2: #{tpu_custom_call.1} parent=1 // pred_check
      _
    $region3: #{tpu_custom_call.1} parent=1 // pred_check_branch
      %13 = sbr.rel (0) target = $region5
    $region4: #{tpu_custom_call.1} parent=1 // pred_region
      %s15 = ssub.s32 256, 256
      %16 = vsyncadd [#allocation3], %s15
      %s17 = sshll.u32 [#allocation2], 4
      %s18 = int_to_ptr.vmem [resolvable:$true] %s17
      %23 = dma.hbm_to_vmem [thread:$0]  %s0, 256, %s18, [#allocation3], 128, 128, 8
    $region5: #{tpu_custom_call.1} parent=1 // pred_fallthru
      _
    // Predicated region
    $region6: #{tpu_custom_call.1} parent=1 // pred_check
      _
    $region7: #{tpu_custom_call.1} parent=1 // pred_check_branch
      %25 = sbr.rel (0) target = $region9
    $region8: #{tpu_custom_call.1} parent=1 // pred_region
      %s27 = ssub.s32 512, 512
      %28 = vsyncadd [#allocation6], %s27
      %s29 = sshll.u32 [#allocation5], 4
      %s30 = int_to_ptr.vmem [resolvable:$true] %s29
      %35 = dma.hbm_to_vmem [thread:$0]  %s1, 512, %s30, [#allocation6], 256, 256, 16
    $region9: #{tpu_custom_call.1} parent=1 // pred_fallthru
      _
    // Predicated region
    $region10: #{tpu_custom_call.1} parent=1 // pred_check
      _
    $region11: #{tpu_custom_call.1} parent=1 // pred_check_branch
      %37 = sbr.rel (0) target = $region13
    $region12: #{tpu_custom_call.1} parent=1 // pred_region
      %s39 = ssub.s32 4096, 4096
      %40 = vsyncadd [#allocation6], %s39
      %s41 = sshll.u32 [#allocation7], 4
      %s42 = int_to_ptr.vmem [resolvable:$true] %s41
      %47 = dma.hbm_to_vmem [thread:$0]  %s2, 4096, %s42, [#allocation6], 256, 256, 16
    $region13: #{tpu_custom_call.1} parent=1 // pred_fallthru
      _
    // Predicated region
    $region14: #{tpu_custom_call.1} parent=1 // pred_check
      _
    $region15: #{tpu_custom_call.1} parent=1 // pred_check_branch
      %49 = sbr.rel (0) target = $region17
    $region16: #{tpu_custom_call.1} parent=1 // pred_region
      _
    $region17: #{tpu_custom_call.1} parent=1 // pred_fallthru
      _
    // Predicated region
    $region18: #{tpu_custom_call.1} parent=1 // pred_check
      _
    $region19: #{tpu_custom_call.1} parent=1 // pred_check_branch
      %51 = sbr.rel (0) target = $region21
    $region20: #{tpu_custom_call.1} parent=1 // pred_region
      %52 = dma.done [#allocation3], 256
    $region21: #{tpu_custom_call.1} parent=1 // pred_fallthru
      _
    // Predicated region
    $region22: #{tpu_custom_call.1} parent=1 // pred_check
      _
    $region23: #{tpu_custom_call.1} parent=1 // pred_check_branch
      %54 = sbr.rel (0) target = $region25
    $region24: #{tpu_custom_call.1} parent=1 // pred_region
      %55 = dma.done [#allocation6], 512
    $region25: #{tpu_custom_call.1} parent=1 // pred_fallthru
      _
    // Predicated region
    $region26: #{tpu_custom_call.1} parent=1 // pred_check
      _
    $region27: #{tpu_custom_call.1} parent=1 // pred_check_branch
      %57 = sbr.rel (0) target = $region29
    $region28: #{tpu_custom_call.1} parent=1 // pred_region
      %58 = dma.done [#allocation6], 4096
    $region29: #{tpu_custom_call.1} parent=1 // pred_fallthru
      _
    %v59 = vld [vmem:[#allocation2] sm:$0xff]
    %v60 = vld [vmem:[#allocation2 + $0x8] sm:$0xff]
    %v61 = vld [vmem:[#allocation5] sm:$0xff]
    %v62 = vld [vmem:[#allocation5 + $0x10] sm:$0xff]
    %v63 = vld [vmem:[%s3] sm:$0x1]
    %v64 = vlaneseq
    %v65 = vshrl.u32 %v64, 7
    %v66 = vsub.s32 0, %v65
    %v67 = vrot.slane %v63, %v66
    %vm68 = vcmask 130048
    %v70 = vsel %vm68, %v59, 0
    %v73 = vsel %vm68, %v60, 0
    %75 = vmatprep.subr.mxu0 0.0
    %76 = vmatpush1.msra.mxu0 0.0
    %77 = vmatprep.subr.mxu0 0.0
    %78 = vmatpush1.msra.mxu0 0.0
    %79 = vmatprep.subr.mxu0 0.0
    %80 = vmatpush1.msra.mxu0 0.0
    %81 = vmatprep.subr.mxu0 0.0
    %82 = vmatpush1.msra.mxu0 0.0
    %83 = vmatprep.subr.mxu0 0.0
    %84 = vmatpush1.msra.mxu0 0.0
    %85 = vmatprep.subr.mxu0 0.0
    %86 = vmatpush1.msra.mxu0 0.0
    %87 = vmatprep.subr.mxu0 0.0
    %88 = vmatpush1.msra.mxu0 0.0
    %89 = vmatprep.subr.mxu0 0.0
    %90 = vmatpush1.msra.mxu0 0.0
    %91 = vmatprep.subr.mxu0 0.0
    %92 = vmatpush1.msra.mxu0 0.0
    %93 = vmatprep.subr.mxu0 0.0
    %94 = vmatpush1.msra.mxu0 0.0
    %95 = vmatprep.subr.mxu0 0.0
    %96 = vmatpush1.msra.mxu0 0.0
    %97 = vmatprep.subr.mxu0 0.0
    %98 = vmatpush1.msra.mxu0 0.0
    %99 = vmatprep.subr.mxu0 0.0
    %100 = vmatpush1.msra.mxu0 0.0
    %101 = vmatprep.subr.mxu0 0.0
    %102 = vmatpush1.msra.mxu0 0.0
    %103 = vmatprep.subr.mxu0 0.0
    %104 = vmatpush1.msra.mxu0 %v62
    %105 = vmatprep.subr.mxu0 0.0
    %106 = vmatpush1.msra.mxu0 %v61
    %107 = vmatprep.subr.mxu0 0.0
    %108 = vmatpush2.msra.mxu0 0.0
    %109 = vmatprep.subr.mxu0 0.0
    %110 = vmatpush2.msra.mxu0 0.0
    %111 = vmatprep.subr.mxu0 0.0
    %112 = vmatpush2.msra.mxu0 0.0
    %113 = vmatprep.subr.mxu0 0.0
    %114 = vmatpush2.msra.mxu0 0.0
    %115 = vmatprep.subr.mxu0 0.0
    %116 = vmatpush2.msra.mxu0 0.0
    %117 = vmatprep.subr.mxu0 0.0
    %118 = vmatpush2.msra.mxu0 0.0
    %119 = vmatprep.subr.mxu0 0.0
    %120 = vmatpush2.msra.mxu0 0.0
    %121 = vmatprep.subr.mxu0 0.0
    %122 = vmatpush2.msra.mxu0 0.0
    %123 = vmatprep.subr.mxu0 0.0
    %124 = vmatpush2.msra.mxu0 0.0
    %125 = vmatprep.subr.mxu0 0.0
    %126 = vmatpush2.msra.mxu0 0.0
    %127 = vmatprep.subr.mxu0 0.0
    %128 = vmatpush2.msra.mxu0 0.0
    %129 = vmatprep.subr.mxu0 0.0
    %130 = vmatpush2.msra.mxu0 0.0
    %131 = vmatprep.subr.mxu0 0.0
    %132 = vmatpush2.msra.mxu0 0.0
    %133 = vmatprep.subr.mxu0 0.0
    %134 = vmatpush2.msra.mxu0 0.0
    %135 = vmatprep.subr.mxu0 0.0
    %136 = vmatpush2.msra.mxu0 0.0
    %137 = vmatprep.subr.mxu0 0.0
    %138 = vmatpush2.msra.mxu0 0.0
    %139 = vmatprep.mubr.f32.mxu0 0.0
    %140 = vmatmul.mubr.f32.gmra.mxu0 %v70
    %v141 = vpop.f32.mrf.mxu0
    %v142 = vadd.f32 %v67, %v141
    %v143 = vpop.f32.mrf.mxu0
    %144 = vmatprep.mubr.f32.mxu0 0.0
    %145 = vmatmul.mubr.f32.gmra.mxu0 %v73
    %v146 = vpop.f32.mrf.mxu0
    %v147 = vadd.f32 %v67, %v146
    %v148 = vpop.f32.mrf.mxu0
    %149 = vdwg.mxu0
    %v150 = vmax.f32 %v142, 0.0
    %v151 = vmax.f32 %v147, 0.0
    %v152 = vld [vmem:[#allocation7] sm:$0xff]
    %v153 = vld [vmem:[#allocation7 + $0x10] sm:$0xff]
    %v154 = vld [vmem:[#allocation7 + $0x20] sm:$0xff]
    %v155 = vld [vmem:[#allocation7 + $0x30] sm:$0xff]
    %v156 = vld [vmem:[#allocation7 + $0x40] sm:$0xff]
    %v157 = vld [vmem:[#allocation7 + $0x50] sm:$0xff]
    %v158 = vld [vmem:[#allocation7 + $0x60] sm:$0xff]
    %v159 = vld [vmem:[#allocation7 + $0x70] sm:$0xff]
    %v160 = vld [vmem:[#allocation7 + $0x80] sm:$0xff]
    %v161 = vld [vmem:[#allocation7 + $0x90] sm:$0xff]
    %v162 = vld [vmem:[#allocation7 + $0xa0] sm:$0xff]
    %v163 = vld [vmem:[#allocation7 + $0xb0] sm:$0xff]
    %v164 = vld [vmem:[#allocation7 + $0xc0] sm:$0xff]
    %v165 = vld [vmem:[#allocation7 + $0xd0] sm:$0xff]
    %v166 = vld [vmem:[#allocation7 + $0xe0] sm:$0xff]
    %v167 = vld [vmem:[#allocation7 + $0xf0] sm:$0xff]
    %v168 = vld [vmem:[%s3 + $0x1] sm:$0x1]
    %v169 = vlaneseq
    %v170 = vshrl.u32 %v169, 7
    %v171 = vsub.s32 0, %v170
    %v172 = vrot.slane %v168, %v171
    %173 = vmatprep.subr.mxu0 0.0
    %174 = vmatpush1.msra.mxu0 %v167
    %175 = vmatprep.subr.mxu0 0.0
    %176 = vmatpush1.msra.mxu0 %v166
    %177 = vmatprep.subr.mxu0 0.0
    %178 = vmatpush1.msra.mxu0 %v165
    %179 = vmatprep.subr.mxu0 0.0
    %180 = vmatpush1.msra.mxu0 %v164
    %181 = vmatprep.subr.mxu0 0.0
    %182 = vmatpush1.msra.mxu0 %v163
    %183 = vmatprep.subr.mxu0 0.0
    %184 = vmatpush1.msra.mxu0 %v162
    %185 = vmatprep.subr.mxu0 0.0
    %186 = vmatpush1.msra.mxu0 %v161
    %187 = vmatprep.subr.mxu0 0.0
    %188 = vmatpush1.msra.mxu0 %v160
    %189 = vmatprep.subr.mxu0 0.0
    %190 = vmatpush1.msra.mxu0 %v159
    %191 = vmatprep.subr.mxu0 0.0
    %192 = vmatpush1.msra.mxu0 %v158
    %193 = vmatprep.subr.mxu0 0.0
    %194 = vmatpush1.msra.mxu0 %v157
    %195 = vmatprep.subr.mxu0 0.0
    %196 = vmatpush1.msra.mxu0 %v156
    %197 = vmatprep.subr.mxu0 0.0
    %198 = vmatpush1.msra.mxu0 %v155
    %199 = vmatprep.subr.mxu0 0.0
    %200 = vmatpush1.msra.mxu0 %v154
    %201 = vmatprep.subr.mxu0 0.0
    %202 = vmatpush1.msra.mxu0 %v153
    %203 = vmatprep.subr.mxu0 0.0
    %204 = vmatpush1.msra.mxu0 %v152
    %205 = vmatprep.subr.mxu0 0.0
    %206 = vmatpush2.msra.mxu0 0.0
    %207 = vmatprep.subr.mxu0 0.0
    %208 = vmatpush2.msra.mxu0 0.0
    %209 = vmatprep.subr.mxu0 0.0
    %210 = vmatpush2.msra.mxu0 0.0
    %211 = vmatprep.subr.mxu0 0.0
    %212 = vmatpush2.msra.mxu0 0.0
    %213 = vmatprep.subr.mxu0 0.0
    %214 = vmatpush2.msra.mxu0 0.0
    %215 = vmatprep.subr.mxu0 0.0
    %216 = vmatpush2.msra.mxu0 0.0
    %217 = vmatprep.subr.mxu0 0.0
    %218 = vmatpush2.msra.mxu0 0.0
    %219 = vmatprep.subr.mxu0 0.0
    %220 = vmatpush2.msra.mxu0 0.0
    %221 = vmatprep.subr.mxu0 0.0
    %222 = vmatpush2.msra.mxu0 0.0
    %223 = vmatprep.subr.mxu0 0.0
    %224 = vmatpush2.msra.mxu0 0.0
    %225 = vmatprep.subr.mxu0 0.0
    %226 = vmatpush2.msra.mxu0 0.0
    %227 = vmatprep.subr.mxu0 0.0
    %228 = vmatpush2.msra.mxu0 0.0
    %229 = vmatprep.subr.mxu0 0.0
    %230 = vmatpush2.msra.mxu0 0.0
    %231 = vmatprep.subr.mxu0 0.0
    %232 = vmatpush2.msra.mxu0 0.0
    %233 = vmatprep.subr.mxu0 0.0
    %234 = vmatpush2.msra.mxu0 0.0
    %235 = vmatprep.subr.mxu0 0.0
    %236 = vmatpush2.msra.mxu0 0.0
    %237 = vmatprep.mubr.f32.mxu0 0.0
    %238 = vmatmul.mubr.f32.gmra.mxu0 %v150
    %v239 = vpop.f32.mrf.mxu0
    %v240 = vadd.f32 %v172, %v239
    %v241 = vpop.f32.mrf.mxu0
    %242 = vmatprep.mubr.f32.mxu0 0.0
    %243 = vmatmul.mubr.f32.gmra.mxu0 %v151
    %v244 = vpop.f32.mrf.mxu0
    %v245 = vadd.f32 %v172, %v244
    %v246 = vpop.f32.mrf.mxu0
    %247 = vdwg.mxu0
    %v248 = vsel %vm68, %v59, 0.0
    %v249 = vrot.slane %v248, 4
    %v250 = vadd.f32 %v248, %v249
    %v251 = vrot.slane %v250, 2
    %v252 = vadd.f32 %v250, %v251
    %v253 = vrot.slane %v252, 1
    %v254 = vadd.f32 %v252, %v253
    %v255 = vsel %vm68, %v60, 0.0
    %v256 = vrot.slane %v255, 4
    %v257 = vadd.f32 %v255, %v256
    %v258 = vrot.slane %v257, 2
    %v259 = vadd.f32 %v257, %v258
    %v260 = vrot.slane %v259, 1
    %v261 = vadd.f32 %v259, %v260
    %v262 = vmul.f32 %v254, 0.125
    %v263 = vmul.f32 %v261, 0.125
    %v264 = vld [vmem:[#allocation5 + $0x8] sm:$0xff]
    %v265 = vld [vmem:[#allocation5 + $0x18] sm:$0xff]
    %v266 = vld [vmem:[%s3 + $0x2] sm:$0x1]
    %v267 = vlaneseq
    %v268 = vshrl.u32 %v267, 7
    %v269 = vsub.s32 0, %v268
    %v270 = vrot.slane %v266, %v269
    %vm273 = vcmask 1041409
    %v274 = vsel %vm273, %v263, %v262
    %v275 = vsel %vm68, %v274, 0
    %277 = vmatprep.subr.mxu0 0.0
    %278 = vmatpush1.msra.mxu0 0.0
    %279 = vmatprep.subr.mxu0 0.0
    %280 = vmatpush1.msra.mxu0 0.0
    %281 = vmatprep.subr.mxu0 0.0
    %282 = vmatpush1.msra.mxu0 0.0
    %283 = vmatprep.subr.mxu0 0.0
    %284 = vmatpush1.msra.mxu0 0.0
    %285 = vmatprep.subr.mxu0 0.0
    %286 = vmatpush1.msra.mxu0 0.0
    %287 = vmatprep.subr.mxu0 0.0
    %288 = vmatpush1.msra.mxu0 0.0
    %289 = vmatprep.subr.mxu0 0.0
    %290 = vmatpush1.msra.mxu0 0.0
    %291 = vmatprep.subr.mxu0 0.0
    %292 = vmatpush1.msra.mxu0 0.0
    %293 = vmatprep.subr.mxu0 0.0
    %294 = vmatpush1.msra.mxu0 0.0
    %295 = vmatprep.subr.mxu0 0.0
    %296 = vmatpush1.msra.mxu0 0.0
    %297 = vmatprep.subr.mxu0 0.0
    %298 = vmatpush1.msra.mxu0 0.0
    %299 = vmatprep.subr.mxu0 0.0
    %300 = vmatpush1.msra.mxu0 0.0
    %301 = vmatprep.subr.mxu0 0.0
    %302 = vmatpush1.msra.mxu0 0.0
    %303 = vmatprep.subr.mxu0 0.0
    %304 = vmatpush1.msra.mxu0 0.0
    %305 = vmatprep.subr.mxu0 0.0
    %306 = vmatpush1.msra.mxu0 %v265
    %307 = vmatprep.subr.mxu0 0.0
    %308 = vmatpush1.msra.mxu0 %v264
    %309 = vmatprep.subr.mxu0 0.0
    %310 = vmatpush2.msra.mxu0 0.0
    %311 = vmatprep.subr.mxu0 0.0
    %312 = vmatpush2.msra.mxu0 0.0
    %313 = vmatprep.subr.mxu0 0.0
    %314 = vmatpush2.msra.mxu0 0.0
    %315 = vmatprep.subr.mxu0 0.0
    %316 = vmatpush2.msra.mxu0 0.0
    %317 = vmatprep.subr.mxu0 0.0
    %318 = vmatpush2.msra.mxu0 0.0
    %319 = vmatprep.subr.mxu0 0.0
    %320 = vmatpush2.msra.mxu0 0.0
    %321 = vmatprep.subr.mxu0 0.0
    %322 = vmatpush2.msra.mxu0 0.0
    %323 = vmatprep.subr.mxu0 0.0
    %324 = vmatpush2.msra.mxu0 0.0
    %325 = vmatprep.subr.mxu0 0.0
    %326 = vmatpush2.msra.mxu0 0.0
    %327 = vmatprep.subr.mxu0 0.0
    %328 = vmatpush2.msra.mxu0 0.0
    %329 = vmatprep.subr.mxu0 0.0
    %330 = vmatpush2.msra.mxu0 0.0
    %331 = vmatprep.subr.mxu0 0.0
    %332 = vmatpush2.msra.mxu0 0.0
    %333 = vmatprep.subr.mxu0 0.0
    %334 = vmatpush2.msra.mxu0 0.0
    %335 = vmatprep.subr.mxu0 0.0
    %336 = vmatpush2.msra.mxu0 0.0
    %337 = vmatprep.subr.mxu0 0.0
    %338 = vmatpush2.msra.mxu0 0.0
    %339 = vmatprep.subr.mxu0 0.0
    %340 = vmatpush2.msra.mxu0 0.0
    %341 = vmatprep.mubr.f32.mxu0 0.0
    %342 = vmatmul.mubr.f32.gmra.mxu0 %v275
    %v343 = vpop.f32.mrf.mxu0
    %v344 = vadd.f32 %v270, %v343
    %v345 = vpop.f32.mrf.mxu0
    %346 = vdwg.mxu0
    %v347 = vmax.f32 %v344, 0.0
    %v348 = vld [vmem:[#allocation7 + $0x8] sm:$0xff]
    %v349 = vld [vmem:[#allocation7 + $0x18] sm:$0xff]
    %v350 = vld [vmem:[#allocation7 + $0x28] sm:$0xff]
    %v351 = vld [vmem:[#allocation7 + $0x38] sm:$0xff]
    %v352 = vld [vmem:[#allocation7 + $0x48] sm:$0xff]
    %v353 = vld [vmem:[#allocation7 + $0x58] sm:$0xff]
    %v354 = vld [vmem:[#allocation7 + $0x68] sm:$0xff]
    %v355 = vld [vmem:[#allocation7 + $0x78] sm:$0xff]
    %v356 = vld [vmem:[#allocation7 + $0x88] sm:$0xff]
    %v357 = vld [vmem:[#allocation7 + $0x98] sm:$0xff]
    %v358 = vld [vmem:[#allocation7 + $0xa8] sm:$0xff]
    %v359 = vld [vmem:[#allocation7 + $0xb8] sm:$0xff]
    %v360 = vld [vmem:[#allocation7 + $0xc8] sm:$0xff]
    %v361 = vld [vmem:[#allocation7 + $0xd8] sm:$0xff]
    %v362 = vld [vmem:[#allocation7 + $0xe8] sm:$0xff]
    %v363 = vld [vmem:[#allocation7 + $0xf8] sm:$0xff]
    %v364 = vld [vmem:[%s3 + $0x3] sm:$0x1]
    %v365 = vlaneseq
    %v366 = vshrl.u32 %v365, 7
    %v367 = vsub.s32 0, %v366
    %v368 = vrot.slane %v364, %v367
    %369 = vmatprep.subr.mxu0 0.0
    %370 = vmatpush1.msra.mxu0 %v363
    %371 = vmatprep.subr.mxu0 0.0
    %372 = vmatpush1.msra.mxu0 %v362
    %373 = vmatprep.subr.mxu0 0.0
    %374 = vmatpush1.msra.mxu0 %v361
    %375 = vmatprep.subr.mxu0 0.0
    %376 = vmatpush1.msra.mxu0 %v360
    %377 = vmatprep.subr.mxu0 0.0
    %378 = vmatpush1.msra.mxu0 %v359
    %379 = vmatprep.subr.mxu0 0.0
    %380 = vmatpush1.msra.mxu0 %v358
    %381 = vmatprep.subr.mxu0 0.0
    %382 = vmatpush1.msra.mxu0 %v357
    %383 = vmatprep.subr.mxu0 0.0
    %384 = vmatpush1.msra.mxu0 %v356
    %385 = vmatprep.subr.mxu0 0.0
    %386 = vmatpush1.msra.mxu0 %v355
    %387 = vmatprep.subr.mxu0 0.0
    %388 = vmatpush1.msra.mxu0 %v354
    %389 = vmatprep.subr.mxu0 0.0
    %390 = vmatpush1.msra.mxu0 %v353
    %391 = vmatprep.subr.mxu0 0.0
    %392 = vmatpush1.msra.mxu0 %v352
    %393 = vmatprep.subr.mxu0 0.0
    %394 = vmatpush1.msra.mxu0 %v351
    %395 = vmatprep.subr.mxu0 0.0
    %396 = vmatpush1.msra.mxu0 %v350
    %397 = vmatprep.subr.mxu0 0.0
    %398 = vmatpush1.msra.mxu0 %v349
    %399 = vmatprep.subr.mxu0 0.0
    %400 = vmatpush1.msra.mxu0 %v348
    %401 = vmatprep.subr.mxu0 0.0
    %402 = vmatpush2.msra.mxu0 0.0
    %403 = vmatprep.subr.mxu0 0.0
    %404 = vmatpush2.msra.mxu0 0.0
    %405 = vmatprep.subr.mxu0 0.0
    %406 = vmatpush2.msra.mxu0 0.0
    %407 = vmatprep.subr.mxu0 0.0
    %408 = vmatpush2.msra.mxu0 0.0
    %409 = vmatprep.subr.mxu0 0.0
    %410 = vmatpush2.msra.mxu0 0.0
    %411 = vmatprep.subr.mxu0 0.0
    %412 = vmatpush2.msra.mxu0 0.0
    %413 = vmatprep.subr.mxu0 0.0
    %414 = vmatpush2.msra.mxu0 0.0
    %415 = vmatprep.subr.mxu0 0.0
    %416 = vmatpush2.msra.mxu0 0.0
    %417 = vmatprep.subr.mxu0 0.0
    %418 = vmatpush2.msra.mxu0 0.0
    %419 = vmatprep.subr.mxu0 0.0
    %420 = vmatpush2.msra.mxu0 0.0
    %421 = vmatprep.subr.mxu0 0.0
    %422 = vmatpush2.msra.mxu0 0.0
    %423 = vmatprep.subr.mxu0 0.0
    %424 = vmatpush2.msra.mxu0 0.0
    %425 = vmatprep.subr.mxu0 0.0
    %426 = vmatpush2.msra.mxu0 0.0
    %427 = vmatprep.subr.mxu0 0.0
    %428 = vmatpush2.msra.mxu0 0.0
    %429 = vmatprep.subr.mxu0 0.0
    %430 = vmatpush2.msra.mxu0 0.0
    %431 = vmatprep.subr.mxu0 0.0
    %432 = vmatpush2.msra.mxu0 0.0
    %433 = vmatprep.mubr.f32.mxu0 0.0
    %434 = vmatmul.mubr.f32.gmra.mxu0 %v347
    %v435 = vpop.f32.mrf.mxu0
    %v436 = vadd.f32 %v368, %v435
    %v437 = vpop.f32.mrf.mxu0
    %438 = vdwg.mxu0
    %v441 = vunpack.c.l.s4 1966171168
    %v442 = vunpack.c.0.s8 %v441
    %v443 = vlaneseq
    %v444 = vshrl.u32 %v443, 7
    %v445 = vsub.s32 %v442, %v444
    %v446 = vrot.slane %v436, %v445
    %v447 = vcombine.high %v446, %v446
    %v449 = vunpack.c.l.s4 1966171168
    %v450 = vunpack.c.0.s8 %v449
    %v451 = vlaneseq
    %v452 = vshrl.u32 %v451, 7
    %v453 = vsub.s32 %v450, %v452
    %v454 = vrot.slane %v446, %v453
    %v456 = vunpack.c.l.s4 1966171168
    %v457 = vunpack.c.0.s8 %v456
    %v458 = vlaneseq
    %v459 = vshrl.u32 %v458, 7
    %v460 = vsub.s32 %v457, %v459
    %v461 = vrot.slane %v447, %v460
    %v462 = vlaneseq
    %v463 = vshrl.u32 %v462, 7
    %v464 = vsub.s32 0, %v463
    %v465 = vrot.slane %v454, %v464
    %v466 = vlaneseq
    %v467 = vshrl.u32 %v466, 7
    %v468 = vsub.s32 0, %v467
    %v469 = vrot.slane %v461, %v468
    %v472 = vadd.f32 %v240, %v465
    %v473 = vadd.f32 %v245, %v469
    %vm474 = vcmask 261120
    %475 = vst.msk [vmem:[#allocation8] sm:$0xff] %vm474, %v472
    %476 = vst.msk [vmem:[#allocation8 + $0x8] sm:$0xff] %vm474, %v473
    // Predicated region
    $region30: #{tpu_custom_call.1} parent=1 // pred_check
      _
    $region31: #{tpu_custom_call.1} parent=1 // pred_check_branch
      %478 = sbr.rel (0) target = $region33
    $region32: #{tpu_custom_call.1} parent=1 // pred_region
      %s480 = ssub.s32 256, 256
      %481 = vsyncadd [#allocation4], %s480
      %s482 = sshll.u32 [#allocation8], 4
      %s483 = int_to_ptr.vmem [resolvable:$true] %s482
      %488 = dma.vmem_to_hbm [thread:$0]  %s483, 256, %s4, [#allocation4], 128, 128, 8
    $region33: #{tpu_custom_call.1} parent=1 // pred_fallthru
      _
    // Predicated region
    $region34: #{tpu_custom_call.1} parent=1 // pred_check
      _
    $region35: #{tpu_custom_call.1} parent=1 // pred_check_branch
      %490 = sbr.rel (0) target = $region37
    $region36: #{tpu_custom_call.1} parent=1 // pred_region
      %491 = dma.done [#allocation4], 256
    $region37: #{tpu_custom_call.1} parent=1 // pred_fallthru
      _
    %492 = vsyncpa [#allocation3], 1
    %493 = vsyncpa [#allocation6], 1
    %494 = vsyncpa [#allocation4], 1

</llo_original>
